<compile_context>
chip_gen: v7x
topology: tpu7x:2x2x1
jax: 0.10.0
libtpu: 0.0.40
codegen_flags: <defaults>
</compile_context>

<pallas_src>
import math
from functools import partial

import jax
import jax.numpy as jnp
from jax.experimental import pallas as pl
from jax.experimental.pallas import tpu as pltpu

H = 128  # hidden width / lane-padded width


def _round_up(n: int, m: int) -> int:
    return ((n + m - 1) // m) * m


# ----------------------------------------------------------------------------
# Pallas kernel: positional encoding + MLP + output layer, weights VMEM-resident.
# ----------------------------------------------------------------------------
def neti_mapper_kernel(x_ref, v_ref, w_ref, w3_ref, out_ref):
    eps = 1e-5          # nn.LayerNorm default
    slope = 0.01        # nn.LeakyReLU default

    # --- Fourier positional encoding (normalization pre-folded into W) ------
    t = x_ref[:, 0:1]                                   # (TB, 1)
    l = x_ref[:, 1:2]                                   # (TB, 1)
    proj = t * v_ref[0:1, :] + l * v_ref[1:2, :]        # (TB, 128)  (cols >= num_w are 0)
    # concat(sin, cos) along lanes (two adjacent lane tiles, no cross-lane shuffle);
    # padded sin cols -> 0, padded cos cols -> 1, both killed by zeroed W rows.
    sc = jnp.concatenate([jnp.sin(proj), jnp.cos(proj)], axis=-1)   # (TB, 256)

    # --- input layer: single K=256 matmul (one MXU weight load on v6e/v7x) --
    h = (jnp.dot(sc, w_ref[0:256, :], preferred_element_type=jnp.float32)
         + v_ref[2:3, :])                               # (TB, 128), cols >= input_dim are 0

    # --- Linear -> LayerNorm -> LeakyReLU (x2) -------------------------------
    def block(h, w, b, g, be):
        h = jnp.dot(h, w, preferred_element_type=jnp.float32) + b
        inv_n = 1.0 / h.shape[-1]
        ssum = jnp.sum(h, axis=-1, keepdims=True)
        ssq = jnp.sum(h * h, axis=-1, keepdims=True)
        mu = ssum * inv_n
        var = jnp.maximum(ssq * inv_n - mu * mu, 0.0)   # clamp: f32 cancellation
        h = (h - mu) * jax.lax.rsqrt(var + eps) * g + be
        return jnp.maximum(h, slope * h)                # LeakyReLU

    h = block(h, w_ref[256:384, :], v_ref[3:4, :], v_ref[4:5, :], v_ref[5:6, :])
    h = block(h, w_ref[384:512, :], v_ref[6:7, :], v_ref[7:8, :], v_ref[8:9, :])

    # --- output layer (truncation already folded into rows of w3) -----------
    out_ref[...] = (jnp.dot(h, w3_ref[0:128, :], preferred_element_type=jnp.float32)
                    + w3_ref[128:129, :])
    # TODO(synk): training-time nested dropout uses host-side python RNG
    # (random.random / torch.randint); not reproduced here (eval semantics).


# ----------------------------------------------------------------------------
# Parameter packing: fold constants, pad to lane-dense tiles, cut DMA count.
# Call ONCE per weight set / truncation setting; keep results device-resident.
# ----------------------------------------------------------------------------
def pack_params(params, truncation_idx=None):
    num_w = params["wt"].shape[1]
    out_dim = params["w3"].shape[1]
    out_p = _round_up(out_dim, H)       # lane-dense output columns
    scale = 1.0 / math.sqrt(num_w)      # constant Fourier normalization, folded into W0

    def pad_row(v):
        v = jnp.asarray(v, jnp.float32).reshape(1, -1)
        return jnp.pad(v, ((0, 0), (0, H - v.shape[1])))

    def pad_mat(w):
        w = jnp.asarray(w, jnp.float32)
        return jnp.pad(w, ((0, H - w.shape[0]), (0, H - w.shape[1])))

    # V: (16, 128) — rows: 0=w_t, 1=w_l, 2=b0, 3=b1, 4=g1, 5=be1, 6=b2, 7=g2, 8=be2
    V = jnp.concatenate(
        [pad_row(params["wt"][0]), pad_row(params["wt"][1]), pad_row(params["b0"]),
         pad_row(params["b1"]), pad_row(params["g1"]), pad_row(params["be1"]),
         pad_row(params["b2"]), pad_row(params["g2"]), pad_row(params["be2"]),
         jnp.zeros((7, H), jnp.float32)], axis=0)

    # W: (512, 128) — [w0s*scale ; w0c*scale ; w1 ; w2], each zero-padded to (128,128)
    W = jnp.concatenate(
        [pad_mat(params["w0s"] * scale), pad_mat(params["w0c"] * scale),
         pad_mat(params["w1"]), pad_mat(params["w2"])], axis=0)

    # W3: (136, out_p) — rows 0:128 = w3 (truncation-masked), row 128 = b3, rest zero;
    #     columns zero-padded to a multiple of 128 for an unmasked (lane-dense) store.
    w3 = jnp.asarray(params["w3"], jnp.float32)
    if truncation_idx is not None:
        row = jnp.arange(w3.shape[0])[:, None]
        w3 = jnp.where(row < truncation_idx, w3, 0.0)   # h[:,k:]=0 then h@w3 == h@masked(w3)
    W3 = jnp.concatenate([w3, jnp.asarray(params["b3"], jnp.float32),
                          jnp.zeros((7, out_dim), jnp.float32)], axis=0)
    W3 = jnp.pad(W3, ((0, 0), (0, out_p - out_dim)))

    V, W, W3 = jax.device_put(V), jax.device_put(W), jax.device_put(W3)
    return V, W, W3, out_dim


# ----------------------------------------------------------------------------
# Jitted wrapper: 1-D grid over batch, resident weight blocks, lane-dense output.
# ----------------------------------------------------------------------------
@partial(jax.jit, static_argnames=("out_dim",))
def neti_mapper_forward(V, W, W3, timestep, unet_layer, *, out_dim):
    B = timestep.shape[0]
    out_p = W3.shape[1]
    x = jnp.stack([timestep.astype(jnp.float32),
                   unet_layer.astype(jnp.float32)], axis=1)          # (B, 2)

    # Batch tiling: TB <= 256 bounds vreg/VMEM live set; pad B up to a TB multiple.
    TB = 256 if B > 256 else _round_up(max(B, 8), 8)
    Bp = _round_up(B, TB)
    if Bp != B:
        x = jnp.pad(x, ((0, Bp - B), (0, 0)))

    # Advisory cost estimate (per padded row: K=256 input dot, 2x K=128 hidden dots,
    # K=128 output dot; sin+cos+2 rsqrt transcendentals).
    flops = Bp * (2 * 256 * H + 2 * (2 * H * H) + 2 * H * out_p)
    transcendentals = Bp * (2 * H + 2)
    bytes_accessed = 4 * (V.size + W.size + W3.size + Bp * 2 + Bp * out_p)

    out = pl.pallas_call(
        neti_mapper_kernel,
        out_shape=jax.ShapeDtypeStruct((Bp, out_p), jnp.float32),
        grid_spec=pltpu.PrefetchScalarGridSpec(
            num_scalar_prefetch=0,
            grid=(Bp // TB,),
            in_specs=[
                pl.BlockSpec((TB, 2), lambda i: (i, 0)),          # per-step batch tile
                pl.BlockSpec((16, H), lambda i: (0, 0)),          # resident across steps
                pl.BlockSpec((512, H), lambda i: (0, 0)),         # resident across steps
                pl.BlockSpec((136, out_p), lambda i: (0, 0)),     # resident across steps
            ],
            out_specs=pl.BlockSpec((TB, out_p), lambda i: (i, 0)),
        ),
        compiler_params=pltpu.CompilerParams(
            dimension_semantics=("parallel",)),                    # 2-TC sharding on v7x
        cost_estimate=pl.CostEstimate(
            flops=flops, transcendentals=transcendentals,
            bytes_accessed=bytes_accessed),
    )(x, V, W, W3)
    return out[:B, :out_dim]


# ----------------------------------------------------------------------------
# Deterministic parameter construction (mirrors NeTIMapper.__init__ shapes).
# ----------------------------------------------------------------------------
def init_params(key, *, num_w=64, num_unet_layers=4, num_time_anchors=10,
                output_dim=64, sigma_t=0.03, sigma_l=2.0, output_bypass=True):
    if output_bypass:
        output_dim *= 2
    input_dim = num_time_anchors * num_unet_layers
    ks = jax.random.split(key, 6)

    # encoder.w : (num_w, 2), randn scaled by (sigma_t, sigma_l)
    w = jax.random.normal(ks[0], (num_w, 2), jnp.float32)
    w = w * jnp.array([sigma_t, sigma_l], jnp.float32)[None, :]

    # encoder.init_layer: anchor encodings -> input_layer weight (input_dim, 2*num_w)
    t_anchors = jnp.arange(0, 1000, 1000 // num_time_anchors, dtype=jnp.float32)
    l_anchors = jnp.arange(num_unet_layers, dtype=jnp.float32)
    tt, ll = jnp.meshgrid(t_anchors, l_anchors, indexing="ij")
    tt, ll = tt.reshape(-1), ll.reshape(-1)                       # nested-loop order
    proj = tt[:, None] * w[None, :, 0] + ll[:, None] * w[None, :, 1]
    anchor = jnp.concatenate([jnp.sin(proj), jnp.cos(proj)], axis=-1)
    anchor = anchor / jnp.linalg.norm(anchor, axis=-1, keepdims=True)  # (input_dim, 2*num_w)

    def linear(k, fan_in, fan_out):
        kw, kb = jax.random.split(k)
        bound = 1.0 / math.sqrt(fan_in)
        Wm = jax.random.uniform(kw, (fan_in, fan_out), jnp.float32, -bound, bound)
        b = jax.random.uniform(kb, (1, fan_out), jnp.float32, -bound, bound)
        return Wm, b

    _, b0 = linear(ks[1], 2 * num_w, input_dim)     # PyTorch keeps default bias init
    w0 = anchor.T                                   # (2*num_w, input_dim)
    w1, b1 = linear(ks[2], input_dim, 128)
    w2, b2 = linear(ks[3], 128, 128)
    w3, b3 = linear(ks[4], 128, output_dim)

    return dict(
        wt=w.T,                                     # (2, num_w)
        w0s=w0[:num_w], w0c=w0[num_w:], b0=b0,
        w1=w1, b1=b1, g1=jnp.ones((1, 128), jnp.float32), be1=jnp.zeros((1, 128), jnp.float32),
        w2=w2, b2=b2, g2=jnp.ones((1, 128), jnp.float32), be2=jnp.zeros((1, 128), jnp.float32),
        w3=w3, b3=b3,
    )


# ----------------------------------------------------------------------------
# Pure-JAX reference, original-module semantics (explicit Fourier normalization,
# in-activation truncation) for correctness check of the folded kernel.
# ----------------------------------------------------------------------------
def reference_forward(params, timestep, unet_layer, truncation_idx=None):
    x = jnp.stack([timestep.astype(jnp.float32),
                   unet_layer.astype(jnp.float32)], axis=1)
    proj = x @ params["wt"]
    v = jnp.concatenate([jnp.sin(proj), jnp.cos(proj)], axis=-1)
    v = v / jnp.linalg.norm(v, axis=-1, keepdims=True)
    w0 = jnp.concatenate([params["w0s"], params["w0c"]], axis=0)
    h = v @ w0 + params["b0"]

    def ln(h, g, b):
        mu = h.mean(-1, keepdims=True)
        var = ((h - mu) ** 2).mean(-1, keepdims=True)
        return (h - mu) / jnp.sqrt(var + 1e-5) * g + b

    h = h @ params["w1"] + params["b1"]
    h = ln(h, params["g1"], params["be1"])
    h = jnp.where(h >= 0, h, 0.01 * h)
    h = h @ params["w2"] + params["b2"]
    h = ln(h, params["g2"], params["be2"])
    h = jnp.where(h >= 0, h, 0.01 * h)
    if truncation_idx is not None:
        h = h.at[:, truncation_idx:].set(0.0)
    return h @ params["w3"] + params["b3"]


if __name__ == "__main__":
    key = jax.random.PRNGKey(0)
    pkey, tkey, lkey = jax.random.split(key, 3)

    params = init_params(pkey)          # num_w=64, 4 unet layers, 10 anchors, out 64*2
    B = 8
    timestep = jax.random.randint(tkey, (B,), 0, 1000).astype(jnp.float32)
    unet_layer = jax.random.randint(lkey, (B,), 0, 4).astype(jnp.float32)

    # Pack once (hoisted out of the per-call path), keep device-resident.
    V, W, W3, out_dim = pack_params(params, truncation_idx=None)

    # no truncation
    out = neti_mapper_forward(V, W, W3, timestep, unet_layer, out_dim=out_dim)
    out = jax.block_until_ready(out)
    ref = reference_forward(params, timestep, unet_layer, truncation_idx=None)
    assert out.shape == (B, out_dim), out.shape
    max_err = float(jnp.max(jnp.abs(out - ref)))
    assert jnp.allclose(out, ref, atol=2e-3, rtol=2e-3), f"max_err={max_err}"

    # second call reuses the same jitted executable + packed params (no repacking)
    out2 = jax.block_until_ready(
        neti_mapper_forward(V, W, W3, timestep, unet_layer, out_dim=out_dim))
    assert jnp.allclose(out2, out), "non-deterministic repeat call"

    # with eval-mode nested-dropout truncation (folded into w3 at pack time)
    Vt, Wt, W3t, out_dim_t = pack_params(params, truncation_idx=50)
    out_t = jax.block_until_ready(
        neti_mapper_forward(Vt, Wt, W3t, timestep, unet_layer, out_dim=out_dim_t))
    ref_t = reference_forward(params, timestep, unet_layer, truncation_idx=50)
    max_err_t = float(jnp.max(jnp.abs(out_t - ref_t)))
    assert jnp.allclose(out_t, ref_t, atol=2e-3, rtol=2e-3), f"max_err={max_err_t}"

    print("KERNEL_OK")
</pallas_src>

<mosaic_0001>
module attributes {stable_mosaic.version = 11 : i64} {
  func.func @neti_mapper_kernel(%arg0: i32, %arg1: memref<8x2xf32, #tpu.memory_space<vmem>>, %arg2: memref<16x128xf32, #tpu.memory_space<vmem>>, %arg3: memref<512x128xf32, #tpu.memory_space<vmem>>, %arg4: memref<136x128xf32, #tpu.memory_space<vmem>>, %arg5: memref<8x128xf32, #tpu.memory_space<vmem>>) attributes {dimension_semantics = [#tpu.dimension_semantics<parallel>], iteration_bounds = array<i64: 1>, scalar_prefetch = 0 : i64, scratch_operands = 0 : i64, tpu.core_type = #tpu.core_type<tc>, window_params = [{transform_indices = @transform_0, window_bounds = array<i64: 8, 2>}, {pipeline_mode = #tpu.pipeline_mode<synchronous>, transform_indices = @transform_1, window_bounds = array<i64: 16, 128>}, {pipeline_mode = #tpu.pipeline_mode<synchronous>, transform_indices = @transform_2, window_bounds = array<i64: 512, 128>}, {pipeline_mode = #tpu.pipeline_mode<synchronous>, transform_indices = @transform_3, window_bounds = array<i64: 136, 128>}, {transform_indices = @transform_4, window_bounds = array<i64: 8, 128>}]} {
    %c0 = arith.constant 0 : index
    %c0_0 = arith.constant 0 : index
    %0 = vector.load %arg1[%c0, %c0_0] : memref<8x2xf32, #tpu.memory_space<vmem>>, vector<8x1xf32>
    %c0_1 = arith.constant 0 : index
    %c1 = arith.constant 1 : index
    %1 = vector.load %arg1[%c0_1, %c1] : memref<8x2xf32, #tpu.memory_space<vmem>>, vector<8x1xf32>
    %c0_2 = arith.constant 0 : index
    %c0_3 = arith.constant 0 : index
    %2 = vector.load %arg2[%c0_2, %c0_3] : memref<16x128xf32, #tpu.memory_space<vmem>>, vector<1x128xf32>
    %3 = vector.broadcast %0 : vector<8x1xf32> to vector<8x128xf32>
    %4 = vector.broadcast %2 : vector<1x128xf32> to vector<8x128xf32>
    %5 = arith.mulf %3, %4 : vector<8x128xf32>
    %c1_4 = arith.constant 1 : index
    %c0_5 = arith.constant 0 : index
    %6 = vector.load %arg2[%c1_4, %c0_5] : memref<16x128xf32, #tpu.memory_space<vmem>>, vector<1x128xf32>
    %7 = vector.broadcast %1 : vector<8x1xf32> to vector<8x128xf32>
    %8 = vector.broadcast %6 : vector<1x128xf32> to vector<8x128xf32>
    %9 = arith.mulf %7, %8 : vector<8x128xf32>
    %10 = arith.addf %5, %9 : vector<8x128xf32>
    %11 = math.sin %10 : vector<8x128xf32>
    %12 = math.cos %10 : vector<8x128xf32>
    %13 = tpu.concatenate %11, %12 in 1 : vector<8x128xf32>, vector<8x128xf32> -> vector<8x256xf32>
    %c0_6 = arith.constant 0 : index
    %c0_7 = arith.constant 0 : index
    %14 = vector.load %arg3[%c0_6, %c0_7] : memref<512x128xf32, #tpu.memory_space<vmem>>, vector<256x128xf32>
    %cst = arith.constant dense<0.000000e+00> : vector<8x128xf32>
    %15 = tpu.matmul %13, %14, %cst {dimension_numbers = #tpu.dot_dimension_numbers<[1], [0], [0], [1], [0, 0, 1, 1], [], []>} : vector<8x256xf32>, vector<256x128xf32>, vector<8x128xf32> -> vector<8x128xf32>
    %c2 = arith.constant 2 : index
    %c0_8 = arith.constant 0 : index
    %16 = vector.load %arg2[%c2, %c0_8] : memref<16x128xf32, #tpu.memory_space<vmem>>, vector<1x128xf32>
    %17 = vector.broadcast %16 : vector<1x128xf32> to vector<8x128xf32>
    %18 = arith.addf %15, %17 : vector<8x128xf32>
    %c256 = arith.constant 256 : index
    %c0_9 = arith.constant 0 : index
    %19 = vector.load %arg3[%c256, %c0_9] : memref<512x128xf32, #tpu.memory_space<vmem>>, vector<128x128xf32>
    %c3 = arith.constant 3 : index
    %c0_10 = arith.constant 0 : index
    %20 = vector.load %arg2[%c3, %c0_10] : memref<16x128xf32, #tpu.memory_space<vmem>>, vector<1x128xf32>
    %c4 = arith.constant 4 : index
    %c0_11 = arith.constant 0 : index
    %21 = vector.load %arg2[%c4, %c0_11] : memref<16x128xf32, #tpu.memory_space<vmem>>, vector<1x128xf32>
    %c5 = arith.constant 5 : index
    %c0_12 = arith.constant 0 : index
    %22 = vector.load %arg2[%c5, %c0_12] : memref<16x128xf32, #tpu.memory_space<vmem>>, vector<1x128xf32>
    %cst_13 = arith.constant dense<0.000000e+00> : vector<8x128xf32>
    %23 = tpu.matmul %18, %19, %cst_13 {dimension_numbers = #tpu.dot_dimension_numbers<[1], [0], [0], [1], [0, 0, 1, 1], [], []>} : vector<8x128xf32>, vector<128x128xf32>, vector<8x128xf32> -> vector<8x128xf32>
    %24 = vector.broadcast %20 : vector<1x128xf32> to vector<8x128xf32>
    %25 = arith.addf %23, %24 : vector<8x128xf32>
    %cst_14 = arith.constant dense<0.000000e+00> : vector<8xf32>
    %26 = vector.multi_reduction <add>, %25, %cst_14 [1] : vector<8x128xf32> to vector<8xf32>
    %27 = vector.shape_cast %26 : vector<8xf32> to vector<8x1xf32>
    %28 = arith.mulf %25, %25 : vector<8x128xf32>
    %cst_15 = arith.constant dense<0.000000e+00> : vector<8xf32>
    %29 = vector.multi_reduction <add>, %28, %cst_15 [1] : vector<8x128xf32> to vector<8xf32>
    %30 = vector.shape_cast %29 : vector<8xf32> to vector<8x1xf32>
    %cst_16 = arith.constant 7.812500e-03 : f32
    %31 = vector.broadcast %cst_16 : f32 to vector<8x1xf32>
    %32 = arith.mulf %27, %31 : vector<8x1xf32>
    %cst_17 = arith.constant 7.812500e-03 : f32
    %33 = vector.broadcast %cst_17 : f32 to vector<8x1xf32>
    %34 = arith.mulf %30, %33 : vector<8x1xf32>
    %35 = arith.mulf %32, %32 : vector<8x1xf32>
    %36 = arith.subf %34, %35 : vector<8x1xf32>
    %cst_18 = arith.constant 0.000000e+00 : f32
    %37 = vector.broadcast %cst_18 : f32 to vector<8x1xf32>
    %38 = arith.maximumf %36, %37 : vector<8x1xf32>
    %39 = vector.broadcast %32 : vector<8x1xf32> to vector<8x128xf32>
    %40 = arith.subf %25, %39 : vector<8x128xf32>
    %cst_19 = arith.constant 9.99999974E-6 : f32
    %41 = vector.broadcast %cst_19 : f32 to vector<8x1xf32>
    %42 = arith.addf %38, %41 : vector<8x1xf32>
    %43 = math.rsqrt %42 : vector<8x1xf32>
    %44 = vector.broadcast %43 : vector<8x1xf32> to vector<8x128xf32>
    %45 = arith.mulf %40, %44 : vector<8x128xf32>
    %46 = vector.broadcast %21 : vector<1x128xf32> to vector<8x128xf32>
    %47 = arith.mulf %45, %46 : vector<8x128xf32>
    %48 = vector.broadcast %22 : vector<1x128xf32> to vector<8x128xf32>
    %49 = arith.addf %47, %48 : vector<8x128xf32>
    %cst_20 = arith.constant 0.00999999977 : f32
    %50 = vector.broadcast %cst_20 : f32 to vector<8x128xf32>
    %51 = arith.mulf %50, %49 : vector<8x128xf32>
    %52 = arith.maximumf %49, %51 : vector<8x128xf32>
    %c384 = arith.constant 384 : index
    %c0_21 = arith.constant 0 : index
    %53 = vector.load %arg3[%c384, %c0_21] : memref<512x128xf32, #tpu.memory_space<vmem>>, vector<128x128xf32>
    %c6 = arith.constant 6 : index
    %c0_22 = arith.constant 0 : index
    %54 = vector.load %arg2[%c6, %c0_22] : memref<16x128xf32, #tpu.memory_space<vmem>>, vector<1x128xf32>
    %c7 = arith.constant 7 : index
    %c0_23 = arith.constant 0 : index
    %55 = vector.load %arg2[%c7, %c0_23] : memref<16x128xf32, #tpu.memory_space<vmem>>, vector<1x128xf32>
    %c8 = arith.constant 8 : index
    %c0_24 = arith.constant 0 : index
    %56 = vector.load %arg2[%c8, %c0_24] : memref<16x128xf32, #tpu.memory_space<vmem>>, vector<1x128xf32>
    %cst_25 = arith.constant dense<0.000000e+00> : vector<8x128xf32>
    %57 = tpu.matmul %52, %53, %cst_25 {dimension_numbers = #tpu.dot_dimension_numbers<[1], [0], [0], [1], [0, 0, 1, 1], [], []>} : vector<8x128xf32>, vector<128x128xf32>, vector<8x128xf32> -> vector<8x128xf32>
    %58 = vector.broadcast %54 : vector<1x128xf32> to vector<8x128xf32>
    %59 = arith.addf %57, %58 : vector<8x128xf32>
    %cst_26 = arith.constant dense<0.000000e+00> : vector<8xf32>
    %60 = vector.multi_reduction <add>, %59, %cst_26 [1] : vector<8x128xf32> to vector<8xf32>
    %61 = vector.shape_cast %60 : vector<8xf32> to vector<8x1xf32>
    %62 = arith.mulf %59, %59 : vector<8x128xf32>
    %cst_27 = arith.constant dense<0.000000e+00> : vector<8xf32>
    %63 = vector.multi_reduction <add>, %62, %cst_27 [1] : vector<8x128xf32> to vector<8xf32>
    %64 = vector.shape_cast %63 : vector<8xf32> to vector<8x1xf32>
    %cst_28 = arith.constant 7.812500e-03 : f32
    %65 = vector.broadcast %cst_28 : f32 to vector<8x1xf32>
    %66 = arith.mulf %61, %65 : vector<8x1xf32>
    %cst_29 = arith.constant 7.812500e-03 : f32
    %67 = vector.broadcast %cst_29 : f32 to vector<8x1xf32>
    %68 = arith.mulf %64, %67 : vector<8x1xf32>
    %69 = arith.mulf %66, %66 : vector<8x1xf32>
    %70 = arith.subf %68, %69 : vector<8x1xf32>
    %cst_30 = arith.constant 0.000000e+00 : f32
    %71 = vector.broadcast %cst_30 : f32 to vector<8x1xf32>
    %72 = arith.maximumf %70, %71 : vector<8x1xf32>
    %73 = vector.broadcast %66 : vector<8x1xf32> to vector<8x128xf32>
    %74 = arith.subf %59, %73 : vector<8x128xf32>
    %cst_31 = arith.constant 9.99999974E-6 : f32
    %75 = vector.broadcast %cst_31 : f32 to vector<8x1xf32>
    %76 = arith.addf %72, %75 : vector<8x1xf32>
    %77 = math.rsqrt %76 : vector<8x1xf32>
    %78 = vector.broadcast %77 : vector<8x1xf32> to vector<8x128xf32>
    %79 = arith.mulf %74, %78 : vector<8x128xf32>
    %80 = vector.broadcast %55 : vector<1x128xf32> to vector<8x128xf32>
    %81 = arith.mulf %79, %80 : vector<8x128xf32>
    %82 = vector.broadcast %56 : vector<1x128xf32> to vector<8x128xf32>
    %83 = arith.addf %81, %82 : vector<8x128xf32>
    %cst_32 = arith.constant 0.00999999977 : f32
    %84 = vector.broadcast %cst_32 : f32 to vector<8x128xf32>
    %85 = arith.mulf %84, %83 : vector<8x128xf32>
    %86 = arith.maximumf %83, %85 : vector<8x128xf32>
    %c0_33 = arith.constant 0 : index
    %c0_34 = arith.constant 0 : index
    %87 = vector.load %arg4[%c0_33, %c0_34] : memref<136x128xf32, #tpu.memory_space<vmem>>, vector<128x128xf32>
    %cst_35 = arith.constant dense<0.000000e+00> : vector<8x128xf32>
    %88 = tpu.matmul %86, %87, %cst_35 {dimension_numbers = #tpu.dot_dimension_numbers<[1], [0], [0], [1], [0, 0, 1, 1], [], []>} : vector<8x128xf32>, vector<128x128xf32>, vector<8x128xf32> -> vector<8x128xf32>
    %c128 = arith.constant 128 : index
    %c0_36 = arith.constant 0 : index
    %89 = vector.load %arg4[%c128, %c0_36] : memref<136x128xf32, #tpu.memory_space<vmem>>, vector<1x128xf32>
    %90 = vector.broadcast %89 : vector<1x128xf32> to vector<8x128xf32>
    %91 = arith.addf %88, %90 : vector<8x128xf32>
    %c0_37 = arith.constant 0 : index
    %c0_38 = arith.constant 0 : index
    %92 = vector.load %arg5[%c0_37, %c0_38] : memref<8x128xf32, #tpu.memory_space<vmem>>, vector<8x128xf32>
    tpu.vector_store %arg5[%c0_37, %c0_38], %91 {strides = array<i32>} : memref<8x128xf32, #tpu.memory_space<vmem>>, vector<8x128xf32>,
    return
  }
  func.func @transform_0(%arg0: i32) -> (i32, i32) {
    %c0_i32 = arith.constant 0 : i32
    %c0_i32_0 = arith.constant 0 : i32
    return %arg0, %c0_i32 : i32, i32
  }
  func.func @transform_1(%arg0: i32) -> (i32, i32) {
    %c0_i32 = arith.constant 0 : i32
    %c0_i32_0 = arith.constant 0 : i32
    %c0_i32_1 = arith.constant 0 : i32
    return %c0_i32, %c0_i32_0 : i32, i32
  }
  func.func @transform_2(%arg0: i32) -> (i32, i32) {
    %c0_i32 = arith.constant 0 : i32
    %c0_i32_0 = arith.constant 0 : i32
    %c0_i32_1 = arith.constant 0 : i32
    return %c0_i32, %c0_i32_0 : i32, i32
  }
  func.func @transform_3(%arg0: i32) -> (i32, i32) {
    %c0_i32 = arith.constant 0 : i32
    %c0_i32_0 = arith.constant 0 : i32
    %c0_i32_1 = arith.constant 0 : i32
    return %c0_i32, %c0_i32_0 : i32, i32
  }
  func.func @transform_4(%arg0: i32) -> (i32, i32) {
    %c0_i32 = arith.constant 0 : i32
    %c0_i32_0 = arith.constant 0 : i32
    return %arg0, %c0_i32 : i32, i32
  }
}

</mosaic_0001>

<llo_original>
// kernel: neti_mapper_forward.1
$region0: #{neti_mapper_forward.1}
  #allocation0 [shape = 'u32[]', space=smem, size = 0x4, offset = 0x4, fixed_abs, tag = 'smem constant byte address 0x4 - core index']
  #allocation1 [shape = 'u32[144,128]{1,0:T(1,128)}', space=vmem, size = 0x12000, scoped, tag = 'internal scratch']
  %s0 = inlined_call_operand.vmem [shape: f32[8,2], index: 0, kind: input, shape index: {}]
  %s1 = inlined_call_operand.vmem [shape: f32[16,128], index: 1, kind: input, shape index: {}]
  %s2 = inlined_call_operand.hbm [shape: f32[512,128], index: 2, kind: input, shape index: {}]
  %s3 = inlined_call_operand.hbm [shape: f32[136,128], index: 3, kind: input, shape index: {}]
  %s4 = inlined_call_operand.hbm [shape: f32[8,128], index: 4, kind: output, shape index: {}]
  %s5 = sld [smem:[#allocation0]]
  $region34: #{neti_mapper_forward.1} parent=0
    _
  %s7 = ssub.s32 1, %s5
  %s8 = scalar_select 0, %s7, %s5
  $region1: #{neti_mapper_forward.1} parent=0
    #allocation2 [shape = 'u8[262144]{0}', space=vmem, size = 0x40000, scoped, tag = 'input window, operand 2, single buffered']
    #allocation3 [shape = 's32[1]{0}', space=sflag, size = 0x4, scoped, tag = 'scoped memory for neti_mapper_forward.1']
    #allocation4 [shape = 's32[1]{0}', space=sflag, size = 0x4, scoped, tag = 'scoped memory for neti_mapper_forward.1']
    #allocation5 [shape = 'u8[69632]{0}', space=vmem, size = 0x11000, scoped, tag = 'input window, operand 3, single buffered']
    #allocation6 [shape = 's32[1]{0}', space=sflag, size = 0x4, scoped, tag = 'scoped memory for neti_mapper_forward.1']
    #allocation7 [shape = 'u8[4096]{0}', space=vmem, size = 0x1000, scoped, tag = 'output window, operand 0, single buffered']
    %9 = vsyncpa [#allocation3], 0
    %10 = vsyncpa [#allocation6], 0
    %11 = vsyncpa [#allocation4], 0
    // Predicated region
    $region2: #{neti_mapper_forward.1} parent=1 // pred_check
      _
    $region3: #{neti_mapper_forward.1} parent=1 // pred_check_branch
      %13 = sbr.rel (0) target = $region5
    $region4: #{neti_mapper_forward.1} parent=1 // pred_region
      _
    $region5: #{neti_mapper_forward.1} parent=1 // pred_fallthru
      _
    // Predicated region
    $region6: #{neti_mapper_forward.1} parent=1 // pred_check
      _
    $region7: #{neti_mapper_forward.1} parent=1 // pred_check_branch
      %15 = sbr.rel (0) target = $region9
    $region8: #{neti_mapper_forward.1} parent=1 // pred_region
      _
    $region9: #{neti_mapper_forward.1} parent=1 // pred_fallthru
      _
    // Predicated region
    $region10: #{neti_mapper_forward.1} parent=1 // pred_check
      _
    $region11: #{neti_mapper_forward.1} parent=1 // pred_check_branch
      %17 = sbr.rel (0) target = $region13
    $region12: #{neti_mapper_forward.1} parent=1 // pred_region
      %s19 = ssub.s32 8192, 8192
      %20 = vsyncadd [#allocation3], %s19
      %s21 = sshll.u32 [#allocation2], 4
      %s22 = int_to_ptr.vmem [resolvable:$true] %s21
      %27 = dma.hbm_to_vmem [thread:$0]  %s2, 8192, %s22, [#allocation3], 128, 128, 8
    $region13: #{neti_mapper_forward.1} parent=1 // pred_fallthru
      _
    // Predicated region
    $region14: #{neti_mapper_forward.1} parent=1 // pred_check
      _
    $region15: #{neti_mapper_forward.1} parent=1 // pred_check_branch
      %29 = sbr.rel (0) target = $region17
    $region16: #{neti_mapper_forward.1} parent=1 // pred_region
      %s31 = ssub.s32 2176, 2176
      %32 = vsyncadd [#allocation6], %s31
      %s33 = sshll.u32 [#allocation5], 4
      %s34 = int_to_ptr.vmem [resolvable:$true] %s33
      %39 = dma.hbm_to_vmem [thread:$0]  %s3, 2176, %s34, [#allocation6], 128, 128, 8
    $region17: #{neti_mapper_forward.1} parent=1 // pred_fallthru
      _
    // Predicated region
    $region18: #{neti_mapper_forward.1} parent=1 // pred_check
      _
    $region19: #{neti_mapper_forward.1} parent=1 // pred_check_branch
      %41 = sbr.rel (0) target = $region21
    $region20: #{neti_mapper_forward.1} parent=1 // pred_region
      %42 = dma.done [#allocation3], 8192
    $region21: #{neti_mapper_forward.1} parent=1 // pred_fallthru
      _
    // Predicated region
    $region22: #{neti_mapper_forward.1} parent=1 // pred_check
      _
    $region23: #{neti_mapper_forward.1} parent=1 // pred_check_branch
      %44 = sbr.rel (0) target = $region25
    $region24: #{neti_mapper_forward.1} parent=1 // pred_region
      %45 = dma.done [#allocation6], 2176
    $region25: #{neti_mapper_forward.1} parent=1 // pred_fallthru
      _
    %v46 = vld [vmem:[%s0] sm:$0xff]
    %v47 = vld [vmem:[%s1] sm:$0x1]
    %49 = vset.pattern.permute.xlu0 0
    %50 = vperm.xlu0 %49, %v46
    %v51 = vpop.permute.xlu0 %50
    %v53 = vlaneseq
    %v54 = vshrl.u32 %v53, 7
    %v55 = vsub.s32 0, %v54
    %v56 = vrot.slane %v47, %v55
    %v57 = vmul.f32 %v51, %v56
    %v58 = vld [vmem:[%s1 + $0x1] sm:$0x1]
    %59 = vset.pattern.permute.xlu0 1
    %60 = vperm.xlu0 %59, %v46
    %v61 = vpop.permute.xlu0 %60
    %v63 = vlaneseq
    %v64 = vshrl.u32 %v63, 7
    %v65 = vsub.s32 0, %v64
    %v66 = vrot.slane %v58, %v65
    %v67 = vmul.f32 %v61, %v66
    %v68 = vadd.f32 %v57, %v67
    %v69 = vand.u32 2147483647, %v68
    %vm70 = vcmp.le.f32.partialorder %v69, 0.7853982
    %vm71 = vcmp.lt.s32.totalorder %v68, 0
    %v72 = vand.u32 %v68, 2139095040
    %v73 = vshrl.u32 %v72, 23
    %v74 = vsub.s32 %v73, 127
    %v75 = vand.u32 2147483647, %v68
    %v76 = vand.u32 %v75, 8388607
    %v77 = vor.u32 %v76, 8388608
    %v78 = vsub.s32 0, %v77
    %v79 = vadd.s32 %v74, 1
    %vm80 = vcmp.gt.s32.totalorder %v79, 0
    %v81 = vsel %vm80, %v79, 0
    %v82 = vshrl.u32 %v81, 5
    %v83 = vand.u32 %v81, 31
    %v84 = vsub.s32 32, %v83
    %v85 = vshrl.u32 683565275, %v84
    %v86 = vshll.u32 683565275, %v83
    %v87 = vshrl.u32 2475754826, %v84
    %v88 = vor.u32 %v86, %v87
    %v89 = vshll.u32 2475754826, %v83
    %v90 = vshrl.u32 2131351028, %v84
    %v91 = vor.u32 %v89, %v90
    %v92 = vshll.u32 2131351028, %v83
    %v93 = vshrl.u32 2102212464, %v84
    %v94 = vor.u32 %v92, %v93
    %v95 = vshll.u32 2102212464, %v83
    %v96 = vshrl.u32 920167782, %v84
    %v97 = vor.u32 %v95, %v96
    %v98 = vshll.u32 920167782, %v83
    %v99 = vshrl.u32 1326507024, %v84
    %v100 = vor.u32 %v98, %v99
    %vm101 = vcmp.lt.s32.totalorder %v82, 1
    %vm102 = vcmp.lt.s32.totalorder %v82, 2
    %vm103 = vcmp.lt.s32.totalorder %v82, 3
    %vm104 = vcmp.lt.s32.totalorder %v82, 4
    %v105 = vsel %vm101, %v85, %v88
    %v106 = vsel %vm104, %v94, 2102212464
    %v107 = vsel %vm103, %v91, %v106
    %v108 = vsel %vm102, %v105, %v107
    %v109 = vsel %vm101, %v88, %v91
    %v110 = vsel %vm104, %v97, 920167782
    %v111 = vsel %vm103, %v94, %v110
    %v112 = vsel %vm102, %v109, %v111
    %v113 = vsel %vm101, %v91, %v94
    %v114 = vsel %vm104, %v100, 1326507024
    %v115 = vsel %vm103, %v97, %v114
    %v116 = vsel %vm102, %v113, %v115
    %v117 = vshll.u32 %v77, 8
    %v118 = vmul.u32.u64.compose %v117, %v116
    %v119 = vextract.low.u32 %v118
    %v120 = vextract.high.u32 %v118
    %v121 = vmul.u32.u64.compose %v117, %v112
    %v122 = vextract.low.u32 %v121
    %v123 = vextract.high.u32 %v121
    %v124 = vmul.u32 %v117, %v108
    %v125 = vadd.s32 %v120, %v122
    %vm126 = vc.u32 %v120, %v122
    %v127 = vadd.s32 %v123, 1
    %v128 = vsel %vm126, %v127, %v123
    %v129 = vadd.s32 %v124, %v128
    %v130 = vadd.s32 %v129, 536870912
    %v131 = vshrl.u32 %v130, 30
    %v132 = vshll.u32 %v131, 30
    %v133 = vsub.s32 %v129, %v132
    %vm134 = vcmp.lt.s32.totalorder %v133, 0
    %v135 = vsub.s32 0, %v133
    %v136 = vsel %vm134, %v135, %v133
    %v137 = vclz %v136
    %v138 = vsub.s32 %v137, 2
    %vm139 = vcmp.gt.s32.totalorder 0, %v138
    %v140 = vsel %vm139, 0, %v138
    %v141 = vsub.s32 32, %v140
    %v142 = vshll.u32 %v133, %v140
    %v143 = vshrl.u32 %v125, %v141
    %v144 = vor.u32 %v142, %v143
    %v145 = vsub.s32 4294967266, %v140
    %v146 = vadd.s32 %v145, 127
    %v147 = vshll.u32 %v146, 23
    %v148 = vor.u32 4788187, %v147
    %v149 = vand.u32 2147483647, %v148
    %v151 = vcvt.s32.f32 %v144
    %v152 = vmul.f32 %v151, %v149
    %v153 = vxor.u32 %v152, 2147483648
    %v154 = vsel %vm71, %v153, %v152
    %v155 = vsub.s32 4, %v131
    %v156 = vsel %vm71, %v155, %v131
    %v157 = vsel %vm70, %v68, %v154
    %v158 = vsel %vm70, 0, %v156
    %v159 = vcosq.f32.pop %v157
    %v160 = vsinq.f32.pop %v157
    %vm161 = vweird.f32 %v68
    %v162 = vadd.s32 %v158, 3
    %v163 = vand.u32 %v162, 3
    %vm164 = vcmp.lt.s32.totalorder %v163, 2
    %vm165 = vcmp.eq.s32.totalorder %v163, 0
    %v166 = vxor.u32 %v160, 2147483648
    %v167 = vsel %vm165, %v159, %v166
    %vm168 = vcmp.eq.s32.totalorder %v163, 2
    %v169 = vxor.u32 %v159, 2147483648
    %v170 = vsel %vm168, %v169, %v160
    %v171 = vsel %vm164, %v167, %v170
    %v172 = vsel %vm161, nan, %v171
    %v173 = vand.u32 2147483647, %v68
    %vm174 = vcmp.le.f32.partialorder %v173, 0.7853982
    %vm175 = vcmp.lt.s32.totalorder %v68, 0
    %v176 = vand.u32 %v68, 2139095040
    %v177 = vshrl.u32 %v176, 23
    %v178 = vsub.s32 %v177, 127
    %v179 = vand.u32 2147483647, %v68
    %v180 = vand.u32 %v179, 8388607
    %v181 = vor.u32 %v180, 8388608
    %v182 = vsub.s32 0, %v181
    %v183 = vadd.s32 %v178, 1
    %vm184 = vcmp.gt.s32.totalorder %v183, 0
    %v185 = vsel %vm184, %v183, 0
    %v186 = vshrl.u32 %v185, 5
    %v187 = vand.u32 %v185, 31
    %v188 = vsub.s32 32, %v187
    %v189 = vshrl.u32 683565275, %v188
    %v190 = vshll.u32 683565275, %v187
    %v191 = vshrl.u32 2475754826, %v188
    %v192 = vor.u32 %v190, %v191
    %v193 = vshll.u32 2475754826, %v187
    %v194 = vshrl.u32 2131351028, %v188
    %v195 = vor.u32 %v193, %v194
    %v196 = vshll.u32 2131351028, %v187
    %v197 = vshrl.u32 2102212464, %v188
    %v198 = vor.u32 %v196, %v197
    %v199 = vshll.u32 2102212464, %v187
    %v200 = vshrl.u32 920167782, %v188
    %v201 = vor.u32 %v199, %v200
    %v202 = vshll.u32 920167782, %v187
    %v203 = vshrl.u32 1326507024, %v188
    %v204 = vor.u32 %v202, %v203
    %vm205 = vcmp.lt.s32.totalorder %v186, 1
    %vm206 = vcmp.lt.s32.totalorder %v186, 2
    %vm207 = vcmp.lt.s32.totalorder %v186, 3
    %vm208 = vcmp.lt.s32.totalorder %v186, 4
    %v209 = vsel %vm205, %v189, %v192
    %v210 = vsel %vm208, %v198, 2102212464
    %v211 = vsel %vm207, %v195, %v210
    %v212 = vsel %vm206, %v209, %v211
    %v213 = vsel %vm205, %v192, %v195
    %v214 = vsel %vm208, %v201, 920167782
    %v215 = vsel %vm207, %v198, %v214
    %v216 = vsel %vm206, %v213, %v215
    %v217 = vsel %vm205, %v195, %v198
    %v218 = vsel %vm208, %v204, 1326507024
    %v219 = vsel %vm207, %v201, %v218
    %v220 = vsel %vm206, %v217, %v219
    %v221 = vshll.u32 %v181, 8
    %v222 = vmul.u32.u64.compose %v221, %v220
    %v223 = vextract.low.u32 %v222
    %v224 = vextract.high.u32 %v222
    %v225 = vmul.u32.u64.compose %v221, %v216
    %v226 = vextract.low.u32 %v225
    %v227 = vextract.high.u32 %v225
    %v228 = vmul.u32 %v221, %v212
    %v229 = vadd.s32 %v224, %v226
    %vm230 = vc.u32 %v224, %v226
    %v231 = vadd.s32 %v227, 1
    %v232 = vsel %vm230, %v231, %v227
    %v233 = vadd.s32 %v228, %v232
    %v234 = vadd.s32 %v233, 536870912
    %v235 = vshrl.u32 %v234, 30
    %v236 = vshll.u32 %v235, 30
    %v237 = vsub.s32 %v233, %v236
    %vm238 = vcmp.lt.s32.totalorder %v237, 0
    %v239 = vsub.s32 0, %v237
    %v240 = vsel %vm238, %v239, %v237
    %v241 = vclz %v240
    %v242 = vsub.s32 %v241, 2
    %vm243 = vcmp.gt.s32.totalorder 0, %v242
    %v244 = vsel %vm243, 0, %v242
    %v245 = vsub.s32 32, %v244
    %v246 = vshll.u32 %v237, %v244
    %v247 = vshrl.u32 %v229, %v245
    %v248 = vor.u32 %v246, %v247
    %v249 = vsub.s32 4294967266, %v244
    %v250 = vadd.s32 %v249, 127
    %v251 = vshll.u32 %v250, 23
    %v252 = vor.u32 4788187, %v251
    %v253 = vand.u32 2147483647, %v252
    %v255 = vcvt.s32.f32 %v248
    %v256 = vmul.f32 %v255, %v253
    %v257 = vxor.u32 %v256, 2147483648
    %v258 = vsel %vm175, %v257, %v256
    %v259 = vsub.s32 4, %v235
    %v260 = vsel %vm175, %v259, %v235
    %v261 = vsel %vm174, %v68, %v258
    %v262 = vsel %vm174, 0, %v260
    %v263 = vcosq.f32.pop %v261
    %v264 = vsinq.f32.pop %v261
    %vm265 = vweird.f32 %v68
    %v266 = vand.u32 %v262, 3
    %vm267 = vcmp.lt.s32.totalorder %v266, 2
    %vm268 = vcmp.eq.s32.totalorder %v266, 0
    %v269 = vxor.u32 %v264, 2147483648
    %v270 = vsel %vm268, %v263, %v269
    %vm271 = vcmp.eq.s32.totalorder %v266, 2
    %v272 = vxor.u32 %v263, 2147483648
    %v273 = vsel %vm271, %v272, %v264
    %v274 = vsel %vm267, %v270, %v273
    %v275 = vsel %vm265, nan, %v274
    %v276 = vld [vmem:[#allocation2] sm:$0xff]
    %v277 = vld [vmem:[#allocation2 + $0x8] sm:$0xff]
    %v278 = vld [vmem:[#allocation2 + $0x10] sm:$0xff]
    %v279 = vld [vmem:[#allocation2 + $0x18] sm:$0xff]
    %v280 = vld [vmem:[#allocation2 + $0x20] sm:$0xff]
    %v281 = vld [vmem:[#allocation2 + $0x28] sm:$0xff]
    %v282 = vld [vmem:[#allocation2 + $0x30] sm:$0xff]
    %v283 = vld [vmem:[#allocation2 + $0x38] sm:$0xff]
    %v284 = vld [vmem:[#allocation2 + $0x40] sm:$0xff]
    %v285 = vld [vmem:[#allocation2 + $0x48] sm:$0xff]
    %v286 = vld [vmem:[#allocation2 + $0x50] sm:$0xff]
    %v287 = vld [vmem:[#allocation2 + $0x58] sm:$0xff]
    %v288 = vld [vmem:[#allocation2 + $0x60] sm:$0xff]
    %v289 = vld [vmem:[#allocation2 + $0x68] sm:$0xff]
    %v290 = vld [vmem:[#allocation2 + $0x70] sm:$0xff]
    %v291 = vld [vmem:[#allocation2 + $0x78] sm:$0xff]
    %v292 = vld [vmem:[#allocation2 + $0x80] sm:$0xff]
    %v293 = vld [vmem:[#allocation2 + $0x88] sm:$0xff]
    %v294 = vld [vmem:[#allocation2 + $0x90] sm:$0xff]
    %v295 = vld [vmem:[#allocation2 + $0x98] sm:$0xff]
    %v296 = vld [vmem:[#allocation2 + $0xa0] sm:$0xff]
    %v297 = vld [vmem:[#allocation2 + $0xa8] sm:$0xff]
    %v298 = vld [vmem:[#allocation2 + $0xb0] sm:$0xff]
    %v299 = vld [vmem:[#allocation2 + $0xb8] sm:$0xff]
    %v300 = vld [vmem:[#allocation2 + $0xc0] sm:$0xff]
    %v301 = vld [vmem:[#allocation2 + $0xc8] sm:$0xff]
    %v302 = vld [vmem:[#allocation2 + $0xd0] sm:$0xff]
    %v303 = vld [vmem:[#allocation2 + $0xd8] sm:$0xff]
    %v304 = vld [vmem:[#allocation2 + $0xe0] sm:$0xff]
    %v305 = vld [vmem:[#allocation2 + $0xe8] sm:$0xff]
    %v306 = vld [vmem:[#allocation2 + $0xf0] sm:$0xff]
    %v307 = vld [vmem:[#allocation2 + $0xf8] sm:$0xff]
    %v308 = vld [vmem:[%s1 + $0x2] sm:$0x1]
    %v309 = vlaneseq
    %v310 = vshrl.u32 %v309, 7
    %v311 = vsub.s32 0, %v310
    %v312 = vrot.slane %v308, %v311
    %313 = vmatprep.subr.mxu0 0.0
    %314 = vmatpush1.msra.mxu0 %v276
    %315 = vmatprep.subr.mxu0 0.0
    %316 = vmatpush1.msra.mxu0 %v277
    %317 = vmatprep.subr.mxu0 0.0
    %318 = vmatpush1.msra.mxu0 %v278
    %319 = vmatprep.subr.mxu0 0.0
    %320 = vmatpush1.msra.mxu0 %v279
    %321 = vmatprep.subr.mxu0 0.0
    %322 = vmatpush1.msra.mxu0 %v280
    %323 = vmatprep.subr.mxu0 0.0
    %324 = vmatpush1.msra.mxu0 %v281
    %325 = vmatprep.subr.mxu0 0.0
    %326 = vmatpush1.msra.mxu0 %v282
    %327 = vmatprep.subr.mxu0 0.0
    %328 = vmatpush1.msra.mxu0 %v283
    %329 = vmatprep.subr.mxu0 0.0
    %330 = vmatpush1.msra.mxu0 %v284
    %331 = vmatprep.subr.mxu0 0.0
    %332 = vmatpush1.msra.mxu0 %v285
    %333 = vmatprep.subr.mxu0 0.0
    %334 = vmatpush1.msra.mxu0 %v286
    %335 = vmatprep.subr.mxu0 0.0
    %336 = vmatpush1.msra.mxu0 %v287
    %337 = vmatprep.subr.mxu0 0.0
    %338 = vmatpush1.msra.mxu0 %v288
    %339 = vmatprep.subr.mxu0 0.0
    %340 = vmatpush1.msra.mxu0 %v289
    %341 = vmatprep.subr.mxu0 0.0
    %342 = vmatpush1.msra.mxu0 %v290
    %343 = vmatprep.subr.mxu0 0.0
    %344 = vmatpush1.msra.mxu0 %v291
    %345 = vmatprep.subr.mxu0 0.0
    %346 = vmatpush1.msra.mxu0 %v292
    %347 = vmatprep.subr.mxu0 0.0
    %348 = vmatpush1.msra.mxu0 %v293
    %349 = vmatprep.subr.mxu0 0.0
    %350 = vmatpush1.msra.mxu0 %v294
    %351 = vmatprep.subr.mxu0 0.0
    %352 = vmatpush1.msra.mxu0 %v295
    %353 = vmatprep.subr.mxu0 0.0
    %354 = vmatpush1.msra.mxu0 %v296
    %355 = vmatprep.subr.mxu0 0.0
    %356 = vmatpush1.msra.mxu0 %v297
    %357 = vmatprep.subr.mxu0 0.0
    %358 = vmatpush1.msra.mxu0 %v298
    %359 = vmatprep.subr.mxu0 0.0
    %360 = vmatpush1.msra.mxu0 %v299
    %361 = vmatprep.subr.mxu0 0.0
    %362 = vmatpush1.msra.mxu0 %v300
    %363 = vmatprep.subr.mxu0 0.0
    %364 = vmatpush1.msra.mxu0 %v301
    %365 = vmatprep.subr.mxu0 0.0
    %366 = vmatpush1.msra.mxu0 %v302
    %367 = vmatprep.subr.mxu0 0.0
    %368 = vmatpush1.msra.mxu0 %v303
    %369 = vmatprep.subr.mxu0 0.0
    %370 = vmatpush1.msra.mxu0 %v304
    %371 = vmatprep.subr.mxu0 0.0
    %372 = vmatpush1.msra.mxu0 %v305
    %373 = vmatprep.subr.mxu0 0.0
    %374 = vmatpush1.msra.mxu0 %v306
    %375 = vmatprep.subr.mxu0 0.0
    %376 = vmatpush1.msra.mxu0 %v307
    %377 = vmatprep.mubr.f32.mxu0 %v275
    %378 = vmatmul.mubr.f32.gmra.mrb[0].mxu0 %v172
    %v379 = vpop.f32.mrb[0].mxu0
    %v380 = vadd.f32 %v312, %v379
    %v381 = vpop.f32.mrb[0].mxu0
    %382 = vdwg.mxu0
    %v383 = vld [vmem:[#allocation2 + $0x100] sm:$0xff]
    %v384 = vld [vmem:[#allocation2 + $0x108] sm:$0xff]
    %v385 = vld [vmem:[#allocation2 + $0x110] sm:$0xff]
    %v386 = vld [vmem:[#allocation2 + $0x118] sm:$0xff]
    %v387 = vld [vmem:[#allocation2 + $0x120] sm:$0xff]
    %v388 = vld [vmem:[#allocation2 + $0x128] sm:$0xff]
    %v389 = vld [vmem:[#allocation2 + $0x130] sm:$0xff]
    %v390 = vld [vmem:[#allocation2 + $0x138] sm:$0xff]
    %v391 = vld [vmem:[#allocation2 + $0x140] sm:$0xff]
    %v392 = vld [vmem:[#allocation2 + $0x148] sm:$0xff]
    %v393 = vld [vmem:[#allocation2 + $0x150] sm:$0xff]
    %v394 = vld [vmem:[#allocation2 + $0x158] sm:$0xff]
    %v395 = vld [vmem:[#allocation2 + $0x160] sm:$0xff]
    %v396 = vld [vmem:[#allocation2 + $0x168] sm:$0xff]
    %v397 = vld [vmem:[#allocation2 + $0x170] sm:$0xff]
    %v398 = vld [vmem:[#allocation2 + $0x178] sm:$0xff]
    %v399 = vld [vmem:[%s1 + $0x3] sm:$0x1]
    %v400 = vld [vmem:[%s1 + $0x4] sm:$0x1]
    %v401 = vld [vmem:[%s1 + $0x5] sm:$0x1]
    %v402 = vlaneseq
    %v403 = vshrl.u32 %v402, 7
    %v404 = vsub.s32 0, %v403
    %v405 = vrot.slane %v399, %v404
    %406 = vmatprep.subr.mxu0 0.0
    %407 = vmatpush1.msra.mxu0 %v383
    %408 = vmatprep.subr.mxu0 0.0
    %409 = vmatpush1.msra.mxu0 %v384
    %410 = vmatprep.subr.mxu0 0.0
    %411 = vmatpush1.msra.mxu0 %v385
    %412 = vmatprep.subr.mxu0 0.0
    %413 = vmatpush1.msra.mxu0 %v386
    %414 = vmatprep.subr.mxu0 0.0
    %415 = vmatpush1.msra.mxu0 %v387
    %416 = vmatprep.subr.mxu0 0.0
    %417 = vmatpush1.msra.mxu0 %v388
    %418 = vmatprep.subr.mxu0 0.0
    %419 = vmatpush1.msra.mxu0 %v389
    %420 = vmatprep.subr.mxu0 0.0
    %421 = vmatpush1.msra.mxu0 %v390
    %422 = vmatprep.subr.mxu0 0.0
    %423 = vmatpush1.msra.mxu0 %v391
    %424 = vmatprep.subr.mxu0 0.0
    %425 = vmatpush1.msra.mxu0 %v392
    %426 = vmatprep.subr.mxu0 0.0
    %427 = vmatpush1.msra.mxu0 %v393
    %428 = vmatprep.subr.mxu0 0.0
    %429 = vmatpush1.msra.mxu0 %v394
    %430 = vmatprep.subr.mxu0 0.0
    %431 = vmatpush1.msra.mxu0 %v395
    %432 = vmatprep.subr.mxu0 0.0
    %433 = vmatpush1.msra.mxu0 %v396
    %434 = vmatprep.subr.mxu0 0.0
    %435 = vmatpush1.msra.mxu0 %v397
    %436 = vmatprep.subr.mxu0 0.0
    %437 = vmatpush1.msra.mxu0 %v398
    %438 = vmatprep.subr.mxu0 0.0
    %439 = vmatpush1.msra.mxu0 0.0
    %440 = vmatprep.subr.mxu0 0.0
    %441 = vmatpush1.msra.mxu0 0.0
    %442 = vmatprep.subr.mxu0 0.0
    %443 = vmatpush1.msra.mxu0 0.0
    %444 = vmatprep.subr.mxu0 0.0
    %445 = vmatpush1.msra.mxu0 0.0
    %446 = vmatprep.subr.mxu0 0.0
    %447 = vmatpush1.msra.mxu0 0.0
    %448 = vmatprep.subr.mxu0 0.0
    %449 = vmatpush1.msra.mxu0 0.0
    %450 = vmatprep.subr.mxu0 0.0
    %451 = vmatpush1.msra.mxu0 0.0
    %452 = vmatprep.subr.mxu0 0.0
    %453 = vmatpush1.msra.mxu0 0.0
    %454 = vmatprep.subr.mxu0 0.0
    %455 = vmatpush1.msra.mxu0 0.0
    %456 = vmatprep.subr.mxu0 0.0
    %457 = vmatpush1.msra.mxu0 0.0
    %458 = vmatprep.subr.mxu0 0.0
    %459 = vmatpush1.msra.mxu0 0.0
    %460 = vmatprep.subr.mxu0 0.0
    %461 = vmatpush1.msra.mxu0 0.0
    %462 = vmatprep.subr.mxu0 0.0
    %463 = vmatpush1.msra.mxu0 0.0
    %464 = vmatprep.subr.mxu0 0.0
    %465 = vmatpush1.msra.mxu0 0.0
    %466 = vmatprep.subr.mxu0 0.0
    %467 = vmatpush1.msra.mxu0 0.0
    %468 = vmatprep.subr.mxu0 0.0
    %469 = vmatpush1.msra.mxu0 0.0
    %470 = vmatprep.mubr.f32.mxu0 0.0
    %471 = vmatmul.mubr.f32.gmra.mrb[0].mxu0 %v380
    %v472 = vpop.f32.mrb[0].mxu0
    %v473 = vadd.f32 %v405, %v472
    %v474 = vpop.f32.mrb[0].mxu0
    %475 = vdwg.mxu0
    %476 = vadd.xlane.f32.xlu0 %v473
    %v477 = vpop.xlane.xlu0 %476
    %v478 = vmul.f32 %v473, %v473
    %479 = vadd.xlane.f32.xlu0 %v478
    %v480 = vpop.xlane.xlu0 %479
    %v481 = vmul.f32 %v477, 0.0078125
    %v482 = vmul.f32 %v480, 0.0078125
    %v483 = vmul.f32 %v481, %v481
    %v484 = vsub.f32 %v482, %v483
    %v485 = vmax.f32 %v484, 0.0
    %v486 = vsub.f32 %v473, %v481
    %v487 = vadd.f32 %v485, 1e-05
    %v488 = vrsqrt.pop %v487
    %v489 = vmul.f32 %v486, %v488
    %v490 = vlaneseq
    %v491 = vshrl.u32 %v490, 7
    %v492 = vsub.s32 0, %v491
    %v493 = vrot.slane %v400, %v492
    %v494 = vmul.f32 %v489, %v493
    %v495 = vlaneseq
    %v496 = vshrl.u32 %v495, 7
    %v497 = vsub.s32 0, %v496
    %v498 = vrot.slane %v401, %v497
    %v499 = vadd.f32 %v494, %v498
    %v500 = vmul.f32 %v499, 0.01
    %v501 = vmax.f32 %v499, %v500
    %v502 = vld [vmem:[#allocation2 + $0x180] sm:$0xff]
    %v503 = vld [vmem:[#allocation2 + $0x188] sm:$0xff]
    %v504 = vld [vmem:[#allocation2 + $0x190] sm:$0xff]
    %v505 = vld [vmem:[#allocation2 + $0x198] sm:$0xff]
    %v506 = vld [vmem:[#allocation2 + $0x1a0] sm:$0xff]
    %v507 = vld [vmem:[#allocation2 + $0x1a8] sm:$0xff]
    %v508 = vld [vmem:[#allocation2 + $0x1b0] sm:$0xff]
    %v509 = vld [vmem:[#allocation2 + $0x1b8] sm:$0xff]
    %v510 = vld [vmem:[#allocation2 + $0x1c0] sm:$0xff]
    %v511 = vld [vmem:[#allocation2 + $0x1c8] sm:$0xff]
    %v512 = vld [vmem:[#allocation2 + $0x1d0] sm:$0xff]
    %v513 = vld [vmem:[#allocation2 + $0x1d8] sm:$0xff]
    %v514 = vld [vmem:[#allocation2 + $0x1e0] sm:$0xff]
    %v515 = vld [vmem:[#allocation2 + $0x1e8] sm:$0xff]
    %v516 = vld [vmem:[#allocation2 + $0x1f0] sm:$0xff]
    %v517 = vld [vmem:[#allocation2 + $0x1f8] sm:$0xff]
    %v518 = vld [vmem:[%s1 + $0x6] sm:$0x1]
    %v519 = vld [vmem:[%s1 + $0x7] sm:$0x1]
    %v520 = vld [vmem:[%s1 + $0x8] sm:$0x1]
    %v521 = vlaneseq
    %v522 = vshrl.u32 %v521, 7
    %v523 = vsub.s32 0, %v522
    %v524 = vrot.slane %v518, %v523
    %525 = vmatprep.subr.mxu0 0.0
    %526 = vmatpush1.msra.mxu0 %v502
    %527 = vmatprep.subr.mxu0 0.0
    %528 = vmatpush1.msra.mxu0 %v503
    %529 = vmatprep.subr.mxu0 0.0
    %530 = vmatpush1.msra.mxu0 %v504
    %531 = vmatprep.subr.mxu0 0.0
    %532 = vmatpush1.msra.mxu0 %v505
    %533 = vmatprep.subr.mxu0 0.0
    %534 = vmatpush1.msra.mxu0 %v506
    %535 = vmatprep.subr.mxu0 0.0
    %536 = vmatpush1.msra.mxu0 %v507
    %537 = vmatprep.subr.mxu0 0.0
    %538 = vmatpush1.msra.mxu0 %v508
    %539 = vmatprep.subr.mxu0 0.0
    %540 = vmatpush1.msra.mxu0 %v509
    %541 = vmatprep.subr.mxu0 0.0
    %542 = vmatpush1.msra.mxu0 %v510
    %543 = vmatprep.subr.mxu0 0.0
    %544 = vmatpush1.msra.mxu0 %v511
    %545 = vmatprep.subr.mxu0 0.0
    %546 = vmatpush1.msra.mxu0 %v512
    %547 = vmatprep.subr.mxu0 0.0
    %548 = vmatpush1.msra.mxu0 %v513
    %549 = vmatprep.subr.mxu0 0.0
    %550 = vmatpush1.msra.mxu0 %v514
    %551 = vmatprep.subr.mxu0 0.0
    %552 = vmatpush1.msra.mxu0 %v515
    %553 = vmatprep.subr.mxu0 0.0
    %554 = vmatpush1.msra.mxu0 %v516
    %555 = vmatprep.subr.mxu0 0.0
    %556 = vmatpush1.msra.mxu0 %v517
    %557 = vmatprep.subr.mxu0 0.0
    %558 = vmatpush1.msra.mxu0 0.0
    %559 = vmatprep.subr.mxu0 0.0
    %560 = vmatpush1.msra.mxu0 0.0
    %561 = vmatprep.subr.mxu0 0.0
    %562 = vmatpush1.msra.mxu0 0.0
    %563 = vmatprep.subr.mxu0 0.0
    %564 = vmatpush1.msra.mxu0 0.0
    %565 = vmatprep.subr.mxu0 0.0
    %566 = vmatpush1.msra.mxu0 0.0
    %567 = vmatprep.subr.mxu0 0.0
    %568 = vmatpush1.msra.mxu0 0.0
    %569 = vmatprep.subr.mxu0 0.0
    %570 = vmatpush1.msra.mxu0 0.0
    %571 = vmatprep.subr.mxu0 0.0
    %572 = vmatpush1.msra.mxu0 0.0
    %573 = vmatprep.subr.mxu0 0.0
    %574 = vmatpush1.msra.mxu0 0.0
    %575 = vmatprep.subr.mxu0 0.0
    %576 = vmatpush1.msra.mxu0 0.0
    %577 = vmatprep.subr.mxu0 0.0
    %578 = vmatpush1.msra.mxu0 0.0
    %579 = vmatprep.subr.mxu0 0.0
    %580 = vmatpush1.msra.mxu0 0.0
    %581 = vmatprep.subr.mxu0 0.0
    %582 = vmatpush1.msra.mxu0 0.0
    %583 = vmatprep.subr.mxu0 0.0
    %584 = vmatpush1.msra.mxu0 0.0
    %585 = vmatprep.subr.mxu0 0.0
    %586 = vmatpush1.msra.mxu0 0.0
    %587 = vmatprep.subr.mxu0 0.0
    %588 = vmatpush1.msra.mxu0 0.0
    %589 = vmatprep.mubr.f32.mxu0 0.0
    %590 = vmatmul.mubr.f32.gmra.mrb[0].mxu0 %v501
    %v591 = vpop.f32.mrb[0].mxu0
    %v592 = vadd.f32 %v524, %v591
    %v593 = vpop.f32.mrb[0].mxu0
    %594 = vdwg.mxu0
    %595 = vadd.xlane.f32.xlu0 %v592
    %v596 = vpop.xlane.xlu0 %595
    %v597 = vmul.f32 %v592, %v592
    %598 = vadd.xlane.f32.xlu0 %v597
    %v599 = vpop.xlane.xlu0 %598
    %v600 = vmul.f32 %v596, 0.0078125
    %v601 = vmul.f32 %v599, 0.0078125
    %v602 = vmul.f32 %v600, %v600
    %v603 = vsub.f32 %v601, %v602
    %v604 = vmax.f32 %v603, 0.0
    %v605 = vsub.f32 %v592, %v600
    %v606 = vadd.f32 %v604, 1e-05
    %v607 = vrsqrt.pop %v606
    %v608 = vmul.f32 %v605, %v607
    %v609 = vlaneseq
    %v610 = vshrl.u32 %v609, 7
    %v611 = vsub.s32 0, %v610
    %v612 = vrot.slane %v519, %v611
    %v613 = vmul.f32 %v608, %v612
    %v614 = vlaneseq
    %v615 = vshrl.u32 %v614, 7
    %v616 = vsub.s32 0, %v615
    %v617 = vrot.slane %v520, %v616
    %v618 = vadd.f32 %v613, %v617
    %v619 = vmul.f32 %v618, 0.01
    %v620 = vmax.f32 %v618, %v619
    %v621 = vld [vmem:[#allocation5] sm:$0xff]
    %v622 = vld [vmem:[#allocation5 + $0x8] sm:$0xff]
    %v623 = vld [vmem:[#allocation5 + $0x10] sm:$0xff]
    %v624 = vld [vmem:[#allocation5 + $0x18] sm:$0xff]
    %v625 = vld [vmem:[#allocation5 + $0x20] sm:$0xff]
    %v626 = vld [vmem:[#allocation5 + $0x28] sm:$0xff]
    %v627 = vld [vmem:[#allocation5 + $0x30] sm:$0xff]
    %v628 = vld [vmem:[#allocation5 + $0x38] sm:$0xff]
    %v629 = vld [vmem:[#allocation5 + $0x40] sm:$0xff]
    %v630 = vld [vmem:[#allocation5 + $0x48] sm:$0xff]
    %v631 = vld [vmem:[#allocation5 + $0x50] sm:$0xff]
    %v632 = vld [vmem:[#allocation5 + $0x58] sm:$0xff]
    %v633 = vld [vmem:[#allocation5 + $0x60] sm:$0xff]
    %v634 = vld [vmem:[#allocation5 + $0x68] sm:$0xff]
    %v635 = vld [vmem:[#allocation5 + $0x70] sm:$0xff]
    %v636 = vld [vmem:[#allocation5 + $0x78] sm:$0xff]
    %v637 = vld [vmem:[#allocation5 + $0x80] sm:$0x1]
    %v638 = vlaneseq
    %v639 = vshrl.u32 %v638, 7
    %v640 = vsub.s32 0, %v639
    %v641 = vrot.slane %v637, %v640
    %642 = vmatprep.subr.mxu0 0.0
    %643 = vmatpush1.msra.mxu0 %v621
    %644 = vmatprep.subr.mxu0 0.0
    %645 = vmatpush1.msra.mxu0 %v622
    %646 = vmatprep.subr.mxu0 0.0
    %647 = vmatpush1.msra.mxu0 %v623
    %648 = vmatprep.subr.mxu0 0.0
    %649 = vmatpush1.msra.mxu0 %v624
    %650 = vmatprep.subr.mxu0 0.0
    %651 = vmatpush1.msra.mxu0 %v625
    %652 = vmatprep.subr.mxu0 0.0
    %653 = vmatpush1.msra.mxu0 %v626
    %654 = vmatprep.subr.mxu0 0.0
    %655 = vmatpush1.msra.mxu0 %v627
    %656 = vmatprep.subr.mxu0 0.0
    %657 = vmatpush1.msra.mxu0 %v628
    %658 = vmatprep.subr.mxu0 0.0
    %659 = vmatpush1.msra.mxu0 %v629
    %660 = vmatprep.subr.mxu0 0.0
    %661 = vmatpush1.msra.mxu0 %v630
    %662 = vmatprep.subr.mxu0 0.0
    %663 = vmatpush1.msra.mxu0 %v631
    %664 = vmatprep.subr.mxu0 0.0
    %665 = vmatpush1.msra.mxu0 %v632
    %666 = vmatprep.subr.mxu0 0.0
    %667 = vmatpush1.msra.mxu0 %v633
    %668 = vmatprep.subr.mxu0 0.0
    %669 = vmatpush1.msra.mxu0 %v634
    %670 = vmatprep.subr.mxu0 0.0
    %671 = vmatpush1.msra.mxu0 %v635
    %672 = vmatprep.subr.mxu0 0.0
    %673 = vmatpush1.msra.mxu0 %v636
    %674 = vmatprep.subr.mxu0 0.0
    %675 = vmatpush1.msra.mxu0 0.0
    %676 = vmatprep.subr.mxu0 0.0
    %677 = vmatpush1.msra.mxu0 0.0
    %678 = vmatprep.subr.mxu0 0.0
    %679 = vmatpush1.msra.mxu0 0.0
    %680 = vmatprep.subr.mxu0 0.0
    %681 = vmatpush1.msra.mxu0 0.0
    %682 = vmatprep.subr.mxu0 0.0
    %683 = vmatpush1.msra.mxu0 0.0
    %684 = vmatprep.subr.mxu0 0.0
    %685 = vmatpush1.msra.mxu0 0.0
    %686 = vmatprep.subr.mxu0 0.0
    %687 = vmatpush1.msra.mxu0 0.0
    %688 = vmatprep.subr.mxu0 0.0
    %689 = vmatpush1.msra.mxu0 0.0
    %690 = vmatprep.subr.mxu0 0.0
    %691 = vmatpush1.msra.mxu0 0.0
    %692 = vmatprep.subr.mxu0 0.0
    %693 = vmatpush1.msra.mxu0 0.0
    %694 = vmatprep.subr.mxu0 0.0
    %695 = vmatpush1.msra.mxu0 0.0
    %696 = vmatprep.subr.mxu0 0.0
    %697 = vmatpush1.msra.mxu0 0.0
    %698 = vmatprep.subr.mxu0 0.0
    %699 = vmatpush1.msra.mxu0 0.0
    %700 = vmatprep.subr.mxu0 0.0
    %701 = vmatpush1.msra.mxu0 0.0
    %702 = vmatprep.subr.mxu0 0.0
    %703 = vmatpush1.msra.mxu0 0.0
    %704 = vmatprep.subr.mxu0 0.0
    %705 = vmatpush1.msra.mxu0 0.0
    %706 = vmatprep.mubr.f32.mxu0 0.0
    %707 = vmatmul.mubr.f32.gmra.mrb[0].mxu0 %v620
    %v708 = vpop.f32.mrb[0].mxu0
    %v709 = vadd.f32 %v641, %v708
    %v710 = vpop.f32.mrb[0].mxu0
    %711 = vdwg.mxu0
    %712 = vst [vmem:[#allocation7] sm:$0xff] %v709
    // Predicated region
    $region26: #{neti_mapper_forward.1} parent=1 // pred_check
      _
    $region27: #{neti_mapper_forward.1} parent=1 // pred_check_branch
      %714 = sbr.rel (0) target = $region29
    $region28: #{neti_mapper_forward.1} parent=1 // pred_region
      %s716 = ssub.s32 128, 128
      %717 = vsyncadd [#allocation4], %s716
      %s719 = sshll.u32 [#allocation7], 4
      %s720 = int_to_ptr.vmem [resolvable:$true] %s719
      %722 = dma.vmem_to_hbm [thread:$0]  %s720, 128, %s4, [#allocation4]
    $region29: #{neti_mapper_forward.1} parent=1 // pred_fallthru
      _
    // Predicated region
    $region30: #{neti_mapper_forward.1} parent=1 // pred_check
      _
    $region31: #{neti_mapper_forward.1} parent=1 // pred_check_branch
      %724 = sbr.rel (0) target = $region33
    $region32: #{neti_mapper_forward.1} parent=1 // pred_region
      %725 = dma.done [#allocation4], 128
    $region33: #{neti_mapper_forward.1} parent=1 // pred_fallthru
      _
    %726 = vsyncpa [#allocation3], 1
    %727 = vsyncpa [#allocation6], 1
    %728 = vsyncpa [#allocation4], 1

</llo_original>
